<compile_context>
chip_gen: v5e
topology: v5e:2x2
jax: 0.10.0
libtpu: 0.0.40
codegen_flags: <defaults>
</compile_context>

<pallas_src>
import functools

import numpy as np

import jax
import jax.numpy as jnp
from jax.experimental import pallas as pl
from jax.experimental.pallas import tpu as pltpu


# ----------------------------------------------------------------------------
# Kernel
# ----------------------------------------------------------------------------
def _convbank_kernel(x_ref, w_ref, b_ref, o_ref, *, segments):
    # x_ref : (bt, C)   bf16  VMEM (batch tile)
    # w_ref : (C, U)    bf16  VMEM (unique conv-bank columns, resident, 1 buffer)
    # b_ref : (1, U)    f32   VMEM (resident, 1 buffer)
    # o_ref : (bt, E*C) f32   VMEM
    #
    # segments: static tuple of (unique_col_start, width, reps) in .flatten(1)
    # order — the x2/x4 time duplication is applied here instead of in W.
    y = jnp.dot(x_ref[...], w_ref[...],
                preferred_element_type=jnp.float32) + b_ref[...]
    pieces = []
    for (start, width, reps) in segments:
        seg = y[:, start:start + width]
        pieces.extend([seg] * reps)
    # Single lane-dense, full-width store of the assembled output row block.
    o_ref[...] = jnp.concatenate(pieces, axis=1)


# ----------------------------------------------------------------------------
# One-time (init) folding of the conv bank into a dense matrix — numpy only,
# never re-traced per forward call.
# ----------------------------------------------------------------------------
def init_convbank_weights(params, C):
    """Fold Conv1d(k=3/6/12, stride=k) weights + biases into one matrix over
    the *unique* output columns.

    Returns:
      W        : (C, U) bfloat16, U = E*C*(1/3 + 1/6 + 1/12) = 7*E*C/12
      bias     : (1, U) float32
      segments : static tuple of (unique_col_start, width, reps) describing how
                 the unique columns expand (x1 / x2 / x4) into the final
                 flatten(1) output order.
    """
    blocks, biases, segments = [], [], []
    col = 0
    for (w, b), k, reps in zip(params, (3, 6, 12), (1, 2, 4)):
        T = C // k
        w_np = np.asarray(w, np.float32)          # (E, k)
        b_np = np.asarray(b, np.float32)          # (E,)
        for oc in range(w_np.shape[0]):
            # W_block[c, t] = w[oc, c - t*k] iff t*k <= c < (t+1)*k
            wb = np.kron(np.eye(T, dtype=np.float32),
                         w_np[oc].reshape(k, 1))  # (C, T)
            blocks.append(wb)
            biases.append(np.full((T,), b_np[oc], np.float32))
            segments.append((col, T, reps))
            col += T
    W_np = np.concatenate(blocks, axis=1)         # (C, U)
    bias_np = np.concatenate(biases)[None, :]     # (1, U)
    W = jnp.asarray(W_np, jnp.bfloat16)
    bias = jnp.asarray(bias_np, jnp.float32)
    return W, bias, tuple(segments)


# ----------------------------------------------------------------------------
# Wrapper
# ----------------------------------------------------------------------------
def _pick_batch_tile(B, b_tile):
    if B <= 16:
        return B                      # one block covering the whole (tiny) batch
    if B <= b_tile:
        # Split into >= 2 grid steps (multiple of 8 rows) so the "parallel"
        # grid axis can be sharded across both TensorCores on v7x.
        bt = ((-(-B // 2)) + 7) // 8 * 8
        return min(bt, B)
    return b_tile


def resnet_feature_extract(input_feature, W, bias, segments, *, b_tile=512):
    """input_feature: (B, C, 1) float32.  Returns (B, E*C) float32."""
    B, C, one = input_feature.shape
    assert one == 1, "trailing axis must be 1 (single conv input channel)"
    assert C % 12 == 0, "spectral length must be divisible by 12"
    assert W.shape[0] == C

    U = W.shape[1]
    out_cols = sum(width * reps for (_, width, reps) in segments)

    xs = input_feature.reshape(B, C).astype(jnp.bfloat16)   # C on the lane axis
    bt = _pick_batch_tile(B, b_tile)
    grid = (pl.cdiv(B, bt),)

    cost = pl.CostEstimate(
        flops=2 * B * C * U,
        transcendentals=0,
        bytes_accessed=2 * B * C + 2 * C * U + 4 * U + 4 * B * out_cols,
    )

    kernel = functools.partial(_convbank_kernel, segments=segments)

    return pl.pallas_call(
        kernel,
        out_shape=jax.ShapeDtypeStruct((B, out_cols), jnp.float32),
        grid=grid,
        in_specs=[
            # x: tiled over batch, double-buffered by default.
            pl.BlockSpec((bt, C), lambda i: (i, 0)),
            # W / bias: constant index_map -> resident, single buffer.
            pl.BlockSpec((C, U), lambda i: (0, 0),
                         pipeline_mode=pl.Buffered(1)),
            pl.BlockSpec((1, U), lambda i: (0, 0),
                         pipeline_mode=pl.Buffered(1)),
        ],
        out_specs=pl.BlockSpec((bt, out_cols), lambda i: (i, 0)),
        compiler_params=pltpu.CompilerParams(
            dimension_semantics=("parallel",)),
        cost_estimate=cost,
    )(xs, W, bias)


# ----------------------------------------------------------------------------
# Deterministic params + pure-JAX reference (mirrors the PyTorch forward)
# ----------------------------------------------------------------------------
def init_params(key, cnn_expand=2):
    """Conv1d params: weight (oc, k) [in_channels=1 squeezed], bias (oc,)."""
    params = []
    for i, k in enumerate((3, 6, 12)):
        kw, kb = jax.random.split(jax.random.fold_in(key, i))
        bound = 1.0 / float(k) ** 0.5   # torch Conv1d default uniform bound
        w = jax.random.uniform(kw, (cnn_expand, k), jnp.float32, -bound, bound)
        b = jax.random.uniform(kb, (cnn_expand,), jnp.float32, -bound, bound)
        params.append((w, b))
    return params


def ref_forward(input_feature, params):
    """Pure-JAX f32 reference mirroring the PyTorch forward exactly."""
    B, C, _ = input_feature.shape
    xs = input_feature.reshape(B, C).astype(jnp.float32)
    ys = []
    for (w, b), k in zip(params, (3, 6, 12)):
        T = C // k
        xr = xs.reshape(B, T, k)
        y = jnp.einsum('btk,ok->bot', xr, w) + b[None, :, None]   # (B, E, T)
        ys.append(y)
    y1, y2, y3 = ys
    y2 = jnp.concatenate([y2, y2], axis=2)
    y3 = jnp.concatenate([y3, y3, y3, y3], axis=2)
    return jnp.concatenate([y1, y2, y3], axis=1).reshape(B, -1)


if __name__ == "__main__":
    key = jax.random.PRNGKey(0)
    pkey, xkey = jax.random.split(key)
    params = init_params(pkey, cnn_expand=2)

    B, C = 2, 48                       # small shapes; C divisible by 12
    x = jax.random.normal(xkey, (B, C, 1), jnp.float32)

    W, bias, segments = init_convbank_weights(params, C)   # built once at init

    out = resnet_feature_extract(x, W, bias, segments)
    jax.block_until_ready(out)

    ref = ref_forward(x, params)
    assert out.shape == (B, 2 * C), out.shape
    # bf16 matmul inputs with f32 accumulation -> bf16-level tolerance.
    if not jnp.allclose(out, ref, atol=3e-2, rtol=3e-2):
        raise AssertionError("Pallas kernel mismatch vs JAX reference")
    print("KERNEL_OK")
</pallas_src>

<mosaic_0001>
module attributes {stable_mosaic.version = 11 : i64} {
  func.func @_convbank_kernel(%arg0: i32, %arg1: memref<2x48xbf16, #tpu.memory_space<vmem>>, %arg2: memref<48x56xbf16, #tpu.memory_space<vmem>>, %arg3: memref<1x56xf32, #tpu.memory_space<vmem>>, %arg4: memref<2x96xf32, #tpu.memory_space<vmem>>) attributes {dimension_semantics = [#tpu.dimension_semantics<parallel>], iteration_bounds = array<i64: 1>, scalar_prefetch = 0 : i64, scratch_operands = 0 : i64, tpu.core_type = #tpu.core_type<tc>, window_params = [{transform_indices = @transform_0, window_bounds = array<i64: 2, 48>}, {pipeline_mode = #tpu.pipeline_mode<synchronous>, transform_indices = @transform_1, window_bounds = array<i64: 48, 56>}, {pipeline_mode = #tpu.pipeline_mode<synchronous>, transform_indices = @transform_2, window_bounds = array<i64: 1, 56>}, {transform_indices = @transform_3, window_bounds = array<i64: 2, 96>}]} {
    %c0 = arith.constant 0 : index
    %c0_0 = arith.constant 0 : index
    %0 = vector.load %arg1[%c0, %c0_0] : memref<2x48xbf16, #tpu.memory_space<vmem>>, vector<2x48xbf16>
    %c0_1 = arith.constant 0 : index
    %c0_2 = arith.constant 0 : index
    %1 = vector.load %arg2[%c0_1, %c0_2] : memref<48x56xbf16, #tpu.memory_space<vmem>>, vector<48x56xbf16>
    %cst = arith.constant dense<0.000000e+00> : vector<2x56xf32>
    %2 = tpu.matmul %0, %1, %cst {dimension_numbers = #tpu.dot_dimension_numbers<[1], [0], [0], [1], [0, 0, 1, 1], [], []>} : vector<2x48xbf16>, vector<48x56xbf16>, vector<2x56xf32> -> vector<2x56xf32>
    %c0_3 = arith.constant 0 : index
    %c0_4 = arith.constant 0 : index
    %3 = vector.load %arg3[%c0_3, %c0_4] : memref<1x56xf32, #tpu.memory_space<vmem>>, vector<1x56xf32>
    %4 = vector.broadcast %3 : vector<1x56xf32> to vector<2x56xf32>
    %5 = arith.addf %2, %4 : vector<2x56xf32>
    %6 = vector.extract_strided_slice %5 {offsets = [0, 0], sizes = [2, 16], strides = [1, 1]} : vector<2x56xf32> to vector<2x16xf32>
    %7 = vector.extract_strided_slice %5 {offsets = [0, 16], sizes = [2, 16], strides = [1, 1]} : vector<2x56xf32> to vector<2x16xf32>
    %8 = vector.extract_strided_slice %5 {offsets = [0, 32], sizes = [2, 8], strides = [1, 1]} : vector<2x56xf32> to vector<2x8xf32>
    %9 = vector.extract_strided_slice %5 {offsets = [0, 40], sizes = [2, 8], strides = [1, 1]} : vector<2x56xf32> to vector<2x8xf32>
    %10 = vector.extract_strided_slice %5 {offsets = [0, 48], sizes = [2, 4], strides = [1, 1]} : vector<2x56xf32> to vector<2x4xf32>
    %11 = vector.extract_strided_slice %5 {offsets = [0, 52], sizes = [2, 4], strides = [1, 1]} : vector<2x56xf32> to vector<2x4xf32>
    %12 = tpu.concatenate %6, %7, %8, %8, %9, %9, %10, %10, %10, %10, %11, %11, %11, %11 in 1 : vector<2x16xf32>, vector<2x16xf32>, vector<2x8xf32>, vector<2x8xf32>, vector<2x8xf32>, vector<2x8xf32>, vector<2x4xf32>, vector<2x4xf32>, vector<2x4xf32>, vector<2x4xf32>, vector<2x4xf32>, vector<2x4xf32>, vector<2x4xf32>, vector<2x4xf32> -> vector<2x96xf32>
    %c0_5 = arith.constant 0 : index
    %c0_6 = arith.constant 0 : index
    %13 = vector.load %arg4[%c0_5, %c0_6] : memref<2x96xf32, #tpu.memory_space<vmem>>, vector<2x96xf32>
    tpu.vector_store %arg4[%c0_5, %c0_6], %12 {strides = array<i32>} : memref<2x96xf32, #tpu.memory_space<vmem>>, vector<2x96xf32>,
    return
  }
  func.func @transform_0(%arg0: i32) -> (i32, i32) {
    %c0_i32 = arith.constant 0 : i32
    %c0_i32_0 = arith.constant 0 : i32
    return %arg0, %c0_i32 : i32, i32
  }
  func.func @transform_1(%arg0: i32) -> (i32, i32) {
    %c0_i32 = arith.constant 0 : i32
    %c0_i32_0 = arith.constant 0 : i32
    %c0_i32_1 = arith.constant 0 : i32
    return %c0_i32, %c0_i32_0 : i32, i32
  }
  func.func @transform_2(%arg0: i32) -> (i32, i32) {
    %c0_i32 = arith.constant 0 : i32
    %c0_i32_0 = arith.constant 0 : i32
    %c0_i32_1 = arith.constant 0 : i32
    return %c0_i32, %c0_i32_0 : i32, i32
  }
  func.func @transform_3(%arg0: i32) -> (i32, i32) {
    %c0_i32 = arith.constant 0 : i32
    %c0_i32_0 = arith.constant 0 : i32
    return %arg0, %c0_i32 : i32, i32
  }
}

</mosaic_0001>

<llo_original>
// kernel: tpu_custom_call.1
$region0: #{tpu_custom_call.1}
  #allocation0 [shape = 'u32[]', space=smem, size = 0x4, offset = 0x4, fixed_abs, tag = 'smem constant byte address 0x4 - core index']
  #allocation1 [shape = 'u32[72,128]{1,0:T(1,128)}', space=vmem, size = 0x9000, scoped, tag = 'internal scratch']
  %s0 = inlined_call_operand.hbm [shape: bf16[2,48], index: 0, kind: input, shape index: {}]
  %s1 = inlined_call_operand.hbm [shape: bf16[48,56], index: 1, kind: input, shape index: {}]
  %s2 = inlined_call_operand.vmem [shape: f32[1,56], index: 2, kind: input, shape index: {}]
  %s3 = inlined_call_operand.hbm [shape: f32[2,96], index: 3, kind: output, shape index: {}]
  %s4 = sld [smem:[#allocation0]]
  $region30: #{tpu_custom_call.1} parent=0
    _
  %s6 = ssub.s32 1, %s4
  %s7 = scalar_select 0, %s6, %s4
  $region1: #{tpu_custom_call.1} parent=0
    #allocation2 [shape = 'u8[512]{0}', space=vmem, size = 0x400, scoped, tag = 'input window, operand 0, single buffered']
    #allocation3 [shape = 's32[1]{0}', space=sflag, size = 0x4, scoped, tag = 'scoped memory for tpu_custom_call.1']
    #allocation4 [shape = 's32[1]{0}', space=sflag, size = 0x4, scoped, tag = 'scoped memory for tpu_custom_call.1']
    #allocation5 [shape = 'u8[12288]{0}', space=vmem, size = 0x3000, scoped, tag = 'input window, operand 1, single buffered']
    #allocation6 [shape = 's32[1]{0}', space=sflag, size = 0x4, scoped, tag = 'scoped memory for tpu_custom_call.1']
    #allocation7 [shape = 'u8[1024]{0}', space=vmem, size = 0x400, scoped, tag = 'output window, operand 0, single buffered']
    %8 = vsyncpa [#allocation3], 0
    %9 = vsyncpa [#allocation6], 0
    %10 = vsyncpa [#allocation4], 0
    // Predicated region
    $region2: #{tpu_custom_call.1} parent=1 // pred_check
      _
    $region3: #{tpu_custom_call.1} parent=1 // pred_check_branch
      %12 = sbr.rel (0) target = $region5
    $region4: #{tpu_custom_call.1} parent=1 // pred_region
      %14 = vsyncadd [#allocation3], 0
      %s16 = sshll.u32 %s0, 4
      %s17 = int_to_ptr.hbm [resolvable:$true] %s16
      %s18 = sshll.u32 [#allocation2], 4
      %s19 = int_to_ptr.vmem [resolvable:$true] %s18
      %21 = dma.hbm_to_vmem [thread:$0]  %s17, 16, %s19, [#allocation3]
    $region5: #{tpu_custom_call.1} parent=1 // pred_fallthru
      _
    // Predicated region
    $region6: #{tpu_custom_call.1} parent=1 // pred_check
      _
    $region7: #{tpu_custom_call.1} parent=1 // pred_check_branch
      %23 = sbr.rel (0) target = $region9
    $region8: #{tpu_custom_call.1} parent=1 // pred_region
      %25 = vsyncadd [#allocation6], 0
      %s26 = sshll.u32 %s1, 4
      %s27 = int_to_ptr.hbm [resolvable:$true] %s26
      %s28 = sshll.u32 [#allocation5], 4
      %s29 = int_to_ptr.vmem [resolvable:$true] %s28
      %34 = dma.hbm_to_vmem [thread:$0]  %s27, 384, %s29, [#allocation6], 64, 64, 4
    $region9: #{tpu_custom_call.1} parent=1 // pred_fallthru
      _
    // Predicated region
    $region10: #{tpu_custom_call.1} parent=1 // pred_check
      _
    $region11: #{tpu_custom_call.1} parent=1 // pred_check_branch
      %36 = sbr.rel (0) target = $region13
    $region12: #{tpu_custom_call.1} parent=1 // pred_region
      _
    $region13: #{tpu_custom_call.1} parent=1 // pred_fallthru
      _
    // Predicated region
    $region14: #{tpu_custom_call.1} parent=1 // pred_check
      _
    $region15: #{tpu_custom_call.1} parent=1 // pred_check_branch
      %38 = sbr.rel (0) target = $region17
    $region16: #{tpu_custom_call.1} parent=1 // pred_region
      %40 = dma.done [#allocation3], 16
    $region17: #{tpu_custom_call.1} parent=1 // pred_fallthru
      _
    // Predicated region
    $region18: #{tpu_custom_call.1} parent=1 // pred_check
      _
    $region19: #{tpu_custom_call.1} parent=1 // pred_check_branch
      %42 = sbr.rel (0) target = $region21
    $region20: #{tpu_custom_call.1} parent=1 // pred_region
      %44 = dma.done [#allocation6], 384
    $region21: #{tpu_custom_call.1} parent=1 // pred_fallthru
      _
    %v46 = vld [vmem:[#allocation2] sm:$0x1]
    %v47 = vld [vmem:[#allocation5] sm:$0xf]
    %v48 = vld [vmem:[#allocation5 + $0x4] sm:$0xf]
    %v49 = vld [vmem:[#allocation5 + $0x8] sm:$0xf]
    %v50 = vld [vmem:[#allocation5 + $0xc] sm:$0xf]
    %v51 = vld [vmem:[#allocation5 + $0x10] sm:$0xf]
    %v52 = vld [vmem:[#allocation5 + $0x14] sm:$0xf]
    %v53 = vld [vmem:[%s2] sm:$0x1]
    %v55 = vperm.slane %v53, 0
    %v63 = vunpack.c.l.b16 %v47
    %v64 = vunpack.c.l.b16 %v48
    %v65 = vunpack.c.l.b16 %v49
    %v66 = vunpack.c.l.b16 %v50
    %v67 = vunpack.c.l.b16 %v51
    %v68 = vunpack.c.l.b16 %v52
    %v69 = vpack.c.b16 %v64, %v63
    %v70 = vpack.c.b16 %v66, %v65
    %v71 = vpack.c.b16 %v68, %v67
    %vm75 = vcmask 392192
    %v77 = vsel %vm75, %v46, 0
    %79 = vmatpush.bf16.msra.mxu0 0
    %80 = vmatpush.bf16.msra.mxu0 0
    %81 = vmatpush.bf16.msra.mxu0 0
    %82 = vmatpush.bf16.msra.mxu0 0
    %83 = vmatpush.bf16.msra.mxu0 0
    %84 = vmatpush.bf16.msra.mxu0 %v71
    %85 = vmatpush.bf16.msra.mxu0 %v70
    %86 = vmatpush.bf16.msra.mxu0 %v69
    %87 = vmatmul.bf16.gmra.mxu0 %v77
    %v88 = vpop.f32.mrf.mxu0
    %v89 = vadd.f32 %v55, %v88
    %v90 = vpop.f32.mrf.mxu0
    %91 = vdwg.mxu0
    %93 = vrot.lane.b32.xlu0 %v89, 8
    %v94 = vpop.permute.xlu0 %93
    %96 = vrot.lane.b32.xlu0 %v89, 16
    %v97 = vpop.permute.xlu0 %96
    %99 = vrot.lane.b32.xlu0 %v89, 20
    %v100 = vpop.permute.xlu0 %99
    %102 = vrot.lane.b32.xlu0 %v89, 24
    %v103 = vpop.permute.xlu0 %102
    %105 = vrot.lane.b32.xlu0 %v89, 28
    %v106 = vpop.permute.xlu0 %105
    %108 = vrot.lane.b32.xlu0 %v89, 32
    %v109 = vpop.permute.xlu0 %108
    %111 = vrot.lane.b32.xlu0 %v89, 36
    %v112 = vpop.permute.xlu0 %111
    %114 = vrot.lane.b32.xlu0 %v89, 40
    %v115 = vpop.permute.xlu0 %114
    %vm117 = vcmask 326656
    %v118 = vsel %vm117, %v89, %v94
    %v119 = vsel %vm75, %v118, %v94
    %vm120 = vcmask 457728
    %v121 = vsel %vm120, %v119, %v97
    %vm122 = vcmask 523264
    %v123 = vsel %vm122, %v121, %v97
    %vm124 = vcmask 556032
    %v125 = vsel %vm124, %v123, %v100
    %vm126 = vcmask 588800
    %v127 = vsel %vm126, %v125, %v103
    %vm128 = vcmask 621568
    %v129 = vsel %vm128, %v127, %v106
    %vm130 = vcmask 654336
    %v131 = vsel %vm130, %v129, %v106
    %vm132 = vcmask 687104
    %v133 = vsel %vm132, %v131, %v109
    %vm134 = vcmask 719872
    %v135 = vsel %vm134, %v133, %v112
    %vm136 = vcmask 752640
    %v137 = vsel %vm136, %v135, %v115
    %vm138 = vcmask 779264
    %139 = vst.msk [vmem:[#allocation7] sm:$0x3] %vm138, %v137
    // Predicated region
    $region22: #{tpu_custom_call.1} parent=1 // pred_check
      _
    $region23: #{tpu_custom_call.1} parent=1 // pred_check_branch
      %141 = sbr.rel (0) target = $region25
    $region24: #{tpu_custom_call.1} parent=1 // pred_region
      %143 = vsyncadd [#allocation4], 0
      %s145 = sshll.u32 [#allocation7], 4
      %s146 = int_to_ptr.vmem [resolvable:$true] %s145
      %s147 = sshll.u32 %s3, 4
      %s148 = int_to_ptr.hbm [resolvable:$true] %s147
      %150 = dma.vmem_to_hbm [thread:$0]  %s146, 32, %s148, [#allocation4]
    $region25: #{tpu_custom_call.1} parent=1 // pred_fallthru
      _
    // Predicated region
    $region26: #{tpu_custom_call.1} parent=1 // pred_check
      _
    $region27: #{tpu_custom_call.1} parent=1 // pred_check_branch
      %152 = sbr.rel (0) target = $region29
    $region28: #{tpu_custom_call.1} parent=1 // pred_region
      %154 = dma.done [#allocation4], 32
    $region29: #{tpu_custom_call.1} parent=1 // pred_fallthru
      _
    %155 = vsyncpa [#allocation3], 1
    %156 = vsyncpa [#allocation6], 1
    %157 = vsyncpa [#allocation4], 1

</llo_original>
